<compile_context>
chip_gen: v5e
topology: v5e:2x2
jax: 0.10.0
libtpu: 0.0.40
codegen_flags: <defaults>
</compile_context>

<pallas_src>
import jax
import jax.numpy as jnp
from jax.experimental import pallas as pl
from jax.experimental.pallas import tpu as pltpu

_NUM_CLASSES = 3
_LOGIT_PAD = 128      # lane-dense padded logit width (in-register only, never stored)
_NEG_LARGE = -1e30    # bias on padded logit lanes -> exp() underflows to exactly 0
_MAX_BLOCK_B = 1024   # batch-tile cap; f32 tiles are tiny vs VMEM on v5e/v6e/v7x


def _mlp_softmax_kernel(x_ref, w1_ref, b1_ref, w2_ref, b2_ref,
                        w3_ref, b3_ref, w4_ref, b4_ref, out_ref):
    """One batch tile: 4 fused Linear layers + ReLUs + softmax, store 3 columns."""
    x = x_ref[...]

    h1 = jnp.dot(x, w1_ref[...], preferred_element_type=jnp.float32) + b1_ref[...]
    h1 = jnp.maximum(h1, 0.0)

    # Dropout(0.5) -> identity at inference time.
    # TODO(synk): training-mode dropout (random mask + 2x scale) not implemented.

    h2 = jnp.dot(h1, w2_ref[...], preferred_element_type=jnp.float32) + b2_ref[...]
    h2 = jnp.maximum(h2, 0.0)

    h3 = jnp.dot(h2, w3_ref[...], preferred_element_type=jnp.float32) + b3_ref[...]
    h3 = jnp.maximum(h3, 0.0)

    # Final layer weights are pre-padded to 128 lanes (MXU/lane friendly); the
    # padded lanes carry a -1e30 bias so after the max-subtracted exp they
    # contribute exactly 0 to the softmax.
    logits = jnp.dot(h3, w4_ref[...], preferred_element_type=jnp.float32) + b4_ref[...]

    m = jnp.max(logits, axis=1, keepdims=True)
    e = jnp.exp(logits - m)
    probs = e / jnp.sum(e, axis=1, keepdims=True)   # exact divide: free accuracy here

    # HBM writeback: only the 3 real class columns (12 B/row, not 512 B/row).
    out_ref[...] = probs[:, :_NUM_CLASSES].astype(out_ref.dtype)


def _round_up(n, m):
    return (n + m - 1) // m * m


def _choose_block_b(batch):
    """Batch-tile rows: multiple of 8 (f32 sublanes), >= 2 tiles when batch > 8."""
    if batch <= 8:
        return batch                       # block == full array dim -> always legal
    half = _round_up(pl.cdiv(batch, 2), 8)  # ensure both v7x TensorCores get a tile
    return max(8, min(_MAX_BLOCK_B, half))


def pad_final_layer(params):
    """One-time prep (outside the jitted forward): pad W4/b4 to 128 logit lanes."""
    w1, b1, w2, b2, w3, b3, w4, b4 = params
    pad_cols = _LOGIT_PAD - w4.shape[1]
    w4p = jnp.pad(w4, ((0, 0), (0, pad_cols)))
    b4p = jnp.pad(b4, ((0, 0), (0, pad_cols)), constant_values=_NEG_LARGE)
    return (w1, b1, w2, b2, w3, b3, w4p, b4p)


@jax.jit
def football_match_predictor_outcome(x, padded_params):
    """x: (batch, input_agg_stats_size) f32 -> (batch, 3) softmax probabilities."""
    batch, in_feat = x.shape
    weights = tuple(padded_params)          # (w1, b1, w2, b2, w3, b3, w4p, b4p)

    block_b = _choose_block_b(batch)
    num_tiles = pl.cdiv(batch, block_b)     # ragged last tile: reads padded, writes masked

    # Constant index_maps -> weights stay resident in VMEM across batch tiles.
    weight_specs = [
        pl.BlockSpec(w.shape, lambda i, _nd=w.ndim: (0,) * _nd) for w in weights
    ]

    return pl.pallas_call(
        _mlp_softmax_kernel,
        out_shape=jax.ShapeDtypeStruct((batch, _NUM_CLASSES), jnp.float32),
        grid=(num_tiles,),
        in_specs=[pl.BlockSpec((block_b, in_feat), lambda i: (i, 0))] + weight_specs,
        out_specs=pl.BlockSpec((block_b, _NUM_CLASSES), lambda i: (i, 0)),
        compiler_params=pltpu.CompilerParams(
            dimension_semantics=("parallel",),   # v7x: batch tiles split across 2 TCs
        ),
    )(x, *weights)


def init_params(key, input_agg_stats_size, hidden_size):
    """PyTorch-Linear-style init: U(-1/sqrt(fan_in), 1/sqrt(fan_in)).

    Weights stored as (in_features, out_features); biases as (1, out_features).
    (Loading a torch state_dict requires transposing nn.Linear weights.)
    """
    dims = [
        (input_agg_stats_size, hidden_size),   # agg_stats_fc Linear 1
        (hidden_size, hidden_size),            # agg_stats_fc Linear 2
        (hidden_size, hidden_size // 2),       # fc_combined Linear 1
        (hidden_size // 2, _NUM_CLASSES),      # fc_combined Linear 2
    ]
    params = []
    for (fan_in, fan_out) in dims:
        key, kw, kb = jax.random.split(key, 3)
        bound = 1.0 / jnp.sqrt(float(fan_in))
        w = jax.random.uniform(kw, (fan_in, fan_out), jnp.float32, -bound, bound)
        b = jax.random.uniform(kb, (1, fan_out), jnp.float32, -bound, bound)
        params.extend([w, b])
    return tuple(params)


def reference_forward(x, params):
    """Plain-JAX reference for correctness checking."""
    w1, b1, w2, b2, w3, b3, w4, b4 = params
    h1 = jnp.maximum(x @ w1 + b1, 0.0)
    h2 = jnp.maximum(h1 @ w2 + b2, 0.0)
    h3 = jnp.maximum(h2 @ w3 + b3, 0.0)
    logits = h3 @ w4 + b4
    return jax.nn.softmax(logits, axis=1)


if __name__ == "__main__":
    # Small shapes consistent with the module: batch=4, input_agg_stats_size=16,
    # hidden_size=32 (constructor arg), output classes = 3.
    batch = 4
    input_agg_stats_size = 16
    hidden_size = 32

    key = jax.random.PRNGKey(0)
    key, kx = jax.random.split(key)
    x = jax.random.normal(kx, (batch, input_agg_stats_size), jnp.float32)

    params = init_params(key, input_agg_stats_size, hidden_size)
    padded_params = pad_final_layer(params)   # hoisted out of the jitted forward

    out = jax.block_until_ready(football_match_predictor_outcome(x, padded_params))
    ref = reference_forward(x, params)

    assert out.shape == (batch, _NUM_CLASSES)
    # MXU vs XLA default-precision f32 matmuls can differ slightly; 1e-3 is ample.
    assert jnp.allclose(out, ref, atol=1e-3, rtol=1e-3), "mismatch vs reference"
    assert jnp.allclose(jnp.sum(out, axis=1), jnp.ones((batch,)), atol=1e-5)

    print("KERNEL_OK")
</pallas_src>

<mosaic_0001>
module attributes {stable_mosaic.version = 11 : i64} {
  func.func @_mlp_softmax_kernel(%arg0: i32, %arg1: memref<4x16xf32, #tpu.memory_space<vmem>>, %arg2: memref<16x32xf32, #tpu.memory_space<vmem>>, %arg3: memref<1x32xf32, #tpu.memory_space<vmem>>, %arg4: memref<32x32xf32, #tpu.memory_space<vmem>>, %arg5: memref<1x32xf32, #tpu.memory_space<vmem>>, %arg6: memref<32x16xf32, #tpu.memory_space<vmem>>, %arg7: memref<1x16xf32, #tpu.memory_space<vmem>>, %arg8: memref<16x128xf32, #tpu.memory_space<vmem>>, %arg9: memref<1x128xf32, #tpu.memory_space<vmem>>, %arg10: memref<4x3xf32, #tpu.memory_space<vmem>>) attributes {dimension_semantics = [#tpu.dimension_semantics<parallel>], iteration_bounds = array<i64: 1>, scalar_prefetch = 0 : i64, scratch_operands = 0 : i64, tpu.core_type = #tpu.core_type<tc>, window_params = [{transform_indices = @transform_0, window_bounds = array<i64: 4, 16>}, {pipeline_mode = #tpu.pipeline_mode<synchronous>, transform_indices = @transform_1, window_bounds = array<i64: 16, 32>}, {pipeline_mode = #tpu.pipeline_mode<synchronous>, transform_indices = @transform_2, window_bounds = array<i64: 1, 32>}, {pipeline_mode = #tpu.pipeline_mode<synchronous>, transform_indices = @transform_3, window_bounds = array<i64: 32, 32>}, {pipeline_mode = #tpu.pipeline_mode<synchronous>, transform_indices = @transform_4, window_bounds = array<i64: 1, 32>}, {pipeline_mode = #tpu.pipeline_mode<synchronous>, transform_indices = @transform_5, window_bounds = array<i64: 32, 16>}, {pipeline_mode = #tpu.pipeline_mode<synchronous>, transform_indices = @transform_6, window_bounds = array<i64: 1, 16>}, {pipeline_mode = #tpu.pipeline_mode<synchronous>, transform_indices = @transform_7, window_bounds = array<i64: 16, 128>}, {pipeline_mode = #tpu.pipeline_mode<synchronous>, transform_indices = @transform_8, window_bounds = array<i64: 1, 128>}, {transform_indices = @transform_9, window_bounds = array<i64: 4, 3>}]} {
    %c0 = arith.constant 0 : index
    %c0_0 = arith.constant 0 : index
    %0 = vector.load %arg1[%c0, %c0_0] : memref<4x16xf32, #tpu.memory_space<vmem>>, vector<4x16xf32>
    %c0_1 = arith.constant 0 : index
    %c0_2 = arith.constant 0 : index
    %1 = vector.load %arg2[%c0_1, %c0_2] : memref<16x32xf32, #tpu.memory_space<vmem>>, vector<16x32xf32>
    %cst = arith.constant dense<0.000000e+00> : vector<4x32xf32>
    %2 = tpu.matmul %0, %1, %cst {dimension_numbers = #tpu.dot_dimension_numbers<[1], [0], [0], [1], [0, 0, 1, 1], [], []>} : vector<4x16xf32>, vector<16x32xf32>, vector<4x32xf32> -> vector<4x32xf32>
    %c0_3 = arith.constant 0 : index
    %c0_4 = arith.constant 0 : index
    %3 = vector.load %arg3[%c0_3, %c0_4] : memref<1x32xf32, #tpu.memory_space<vmem>>, vector<1x32xf32>
    %4 = vector.broadcast %3 : vector<1x32xf32> to vector<4x32xf32>
    %5 = arith.addf %2, %4 : vector<4x32xf32>
    %cst_5 = arith.constant 0.000000e+00 : f32
    %6 = vector.broadcast %cst_5 : f32 to vector<4x32xf32>
    %7 = arith.maximumf %5, %6 : vector<4x32xf32>
    %c0_6 = arith.constant 0 : index
    %c0_7 = arith.constant 0 : index
    %8 = vector.load %arg4[%c0_6, %c0_7] : memref<32x32xf32, #tpu.memory_space<vmem>>, vector<32x32xf32>
    %cst_8 = arith.constant dense<0.000000e+00> : vector<4x32xf32>
    %9 = tpu.matmul %7, %8, %cst_8 {dimension_numbers = #tpu.dot_dimension_numbers<[1], [0], [0], [1], [0, 0, 1, 1], [], []>} : vector<4x32xf32>, vector<32x32xf32>, vector<4x32xf32> -> vector<4x32xf32>
    %c0_9 = arith.constant 0 : index
    %c0_10 = arith.constant 0 : index
    %10 = vector.load %arg5[%c0_9, %c0_10] : memref<1x32xf32, #tpu.memory_space<vmem>>, vector<1x32xf32>
    %11 = vector.broadcast %10 : vector<1x32xf32> to vector<4x32xf32>
    %12 = arith.addf %9, %11 : vector<4x32xf32>
    %cst_11 = arith.constant 0.000000e+00 : f32
    %13 = vector.broadcast %cst_11 : f32 to vector<4x32xf32>
    %14 = arith.maximumf %12, %13 : vector<4x32xf32>
    %c0_12 = arith.constant 0 : index
    %c0_13 = arith.constant 0 : index
    %15 = vector.load %arg6[%c0_12, %c0_13] : memref<32x16xf32, #tpu.memory_space<vmem>>, vector<32x16xf32>
    %cst_14 = arith.constant dense<0.000000e+00> : vector<4x16xf32>
    %16 = tpu.matmul %14, %15, %cst_14 {dimension_numbers = #tpu.dot_dimension_numbers<[1], [0], [0], [1], [0, 0, 1, 1], [], []>} : vector<4x32xf32>, vector<32x16xf32>, vector<4x16xf32> -> vector<4x16xf32>
    %c0_15 = arith.constant 0 : index
    %c0_16 = arith.constant 0 : index
    %17 = vector.load %arg7[%c0_15, %c0_16] : memref<1x16xf32, #tpu.memory_space<vmem>>, vector<1x16xf32>
    %18 = vector.broadcast %17 : vector<1x16xf32> to vector<4x16xf32>
    %19 = arith.addf %16, %18 : vector<4x16xf32>
    %cst_17 = arith.constant 0.000000e+00 : f32
    %20 = vector.broadcast %cst_17 : f32 to vector<4x16xf32>
    %21 = arith.maximumf %19, %20 : vector<4x16xf32>
    %c0_18 = arith.constant 0 : index
    %c0_19 = arith.constant 0 : index
    %22 = vector.load %arg8[%c0_18, %c0_19] : memref<16x128xf32, #tpu.memory_space<vmem>>, vector<16x128xf32>
    %cst_20 = arith.constant dense<0.000000e+00> : vector<4x128xf32>
    %23 = tpu.matmul %21, %22, %cst_20 {dimension_numbers = #tpu.dot_dimension_numbers<[1], [0], [0], [1], [0, 0, 1, 1], [], []>} : vector<4x16xf32>, vector<16x128xf32>, vector<4x128xf32> -> vector<4x128xf32>
    %c0_21 = arith.constant 0 : index
    %c0_22 = arith.constant 0 : index
    %24 = vector.load %arg9[%c0_21, %c0_22] : memref<1x128xf32, #tpu.memory_space<vmem>>, vector<1x128xf32>
    %25 = vector.broadcast %24 : vector<1x128xf32> to vector<4x128xf32>
    %26 = arith.addf %23, %25 : vector<4x128xf32>
    %cst_23 = arith.constant dense<0xFF800000> : vector<4xf32>
    %27 = vector.multi_reduction <maximumf>, %26, %cst_23 [1] : vector<4x128xf32> to vector<4xf32>
    %28 = vector.shape_cast %27 : vector<4xf32> to vector<4x1xf32>
    %29 = vector.broadcast %28 : vector<4x1xf32> to vector<4x128xf32>
    %30 = arith.subf %26, %29 : vector<4x128xf32>
    %31 = math.exp %30 : vector<4x128xf32>
    %cst_24 = arith.constant dense<0.000000e+00> : vector<4xf32>
    %32 = vector.multi_reduction <add>, %31, %cst_24 [1] : vector<4x128xf32> to vector<4xf32>
    %33 = vector.shape_cast %32 : vector<4xf32> to vector<4x1xf32>
    %34 = vector.broadcast %33 : vector<4x1xf32> to vector<4x128xf32>
    %35 = arith.divf %31, %34 : vector<4x128xf32>
    %36 = vector.extract_strided_slice %35 {offsets = [0, 0], sizes = [4, 3], strides = [1, 1]} : vector<4x128xf32> to vector<4x3xf32>
    %c0_25 = arith.constant 0 : index
    %c0_26 = arith.constant 0 : index
    %37 = vector.load %arg10[%c0_25, %c0_26] : memref<4x3xf32, #tpu.memory_space<vmem>>, vector<4x3xf32>
    tpu.vector_store %arg10[%c0_25, %c0_26], %36 {strides = array<i32>} : memref<4x3xf32, #tpu.memory_space<vmem>>, vector<4x3xf32>,
    return
  }
  func.func @transform_0(%arg0: i32) -> (i32, i32) {
    %c0_i32 = arith.constant 0 : i32
    %c0_i32_0 = arith.constant 0 : i32
    return %arg0, %c0_i32 : i32, i32
  }
  func.func @transform_1(%arg0: i32) -> (i32, i32) {
    %c0_i32 = arith.constant 0 : i32
    %c0_i32_0 = arith.constant 0 : i32
    %c0_i32_1 = arith.constant 0 : i32
    return %c0_i32, %c0_i32_0 : i32, i32
  }
  func.func @transform_2(%arg0: i32) -> (i32, i32) {
    %c0_i32 = arith.constant 0 : i32
    %c0_i32_0 = arith.constant 0 : i32
    %c0_i32_1 = arith.constant 0 : i32
    return %c0_i32, %c0_i32_0 : i32, i32
  }
  func.func @transform_3(%arg0: i32) -> (i32, i32) {
    %c0_i32 = arith.constant 0 : i32
    %c0_i32_0 = arith.constant 0 : i32
    %c0_i32_1 = arith.constant 0 : i32
    return %c0_i32, %c0_i32_0 : i32, i32
  }
  func.func @transform_4(%arg0: i32) -> (i32, i32) {
    %c0_i32 = arith.constant 0 : i32
    %c0_i32_0 = arith.constant 0 : i32
    %c0_i32_1 = arith.constant 0 : i32
    return %c0_i32, %c0_i32_0 : i32, i32
  }
  func.func @transform_5(%arg0: i32) -> (i32, i32) {
    %c0_i32 = arith.constant 0 : i32
    %c0_i32_0 = arith.constant 0 : i32
    %c0_i32_1 = arith.constant 0 : i32
    return %c0_i32, %c0_i32_0 : i32, i32
  }
  func.func @transform_6(%arg0: i32) -> (i32, i32) {
    %c0_i32 = arith.constant 0 : i32
    %c0_i32_0 = arith.constant 0 : i32
    %c0_i32_1 = arith.constant 0 : i32
    return %c0_i32, %c0_i32_0 : i32, i32
  }
  func.func @transform_7(%arg0: i32) -> (i32, i32) {
    %c0_i32 = arith.constant 0 : i32
    %c0_i32_0 = arith.constant 0 : i32
    %c0_i32_1 = arith.constant 0 : i32
    return %c0_i32, %c0_i32_0 : i32, i32
  }
  func.func @transform_8(%arg0: i32) -> (i32, i32) {
    %c0_i32 = arith.constant 0 : i32
    %c0_i32_0 = arith.constant 0 : i32
    %c0_i32_1 = arith.constant 0 : i32
    return %c0_i32, %c0_i32_0 : i32, i32
  }
  func.func @transform_9(%arg0: i32) -> (i32, i32) {
    %c0_i32 = arith.constant 0 : i32
    %c0_i32_0 = arith.constant 0 : i32
    return %arg0, %c0_i32 : i32, i32
  }
}

</mosaic_0001>

<llo_original>
// kernel: football_match_predictor_outcome.1
$region0: #{football_match_predictor_outcome.1}
  #allocation0 [shape = 'u32[]', space=smem, size = 0x4, offset = 0x4, fixed_abs, tag = 'smem constant byte address 0x4 - core index']
  #allocation1 [shape = 'u32[72,128]{1,0:T(1,128)}', space=vmem, size = 0x9000, scoped, tag = 'internal scratch']
  %s0 = inlined_call_operand.hbm [shape: f32[4,16], index: 0, kind: input, shape index: {}]
  %s1 = inlined_call_operand.vmem [shape: f32[16,32], index: 1, kind: input, shape index: {}]
  %s2 = inlined_call_operand.vmem [shape: f32[1,32], index: 2, kind: input, shape index: {}]
  %s3 = inlined_call_operand.vmem [shape: f32[32,32], index: 3, kind: input, shape index: {}]
  %s4 = inlined_call_operand.vmem [shape: f32[1,32], index: 4, kind: input, shape index: {}]
  %s5 = inlined_call_operand.vmem [shape: f32[32,16], index: 5, kind: input, shape index: {}]
  %s6 = inlined_call_operand.vmem [shape: f32[1,16], index: 6, kind: input, shape index: {}]
  %s7 = inlined_call_operand.hbm [shape: f32[16,128], index: 7, kind: input, shape index: {}]
  %s8 = inlined_call_operand.vmem [shape: f32[1,128], index: 8, kind: input, shape index: {}]
  %s9 = inlined_call_operand.hbm [shape: f32[4,3], index: 9, kind: output, shape index: {}]
  %s10 = sld [smem:[#allocation0]]
  $region54: #{football_match_predictor_outcome.1} parent=0
    _
  %s12 = ssub.s32 1, %s10
  %s13 = scalar_select 0, %s12, %s10
  $region1: #{football_match_predictor_outcome.1} parent=0
    #allocation2 [shape = 'u8[2048]{0}', space=vmem, size = 0x800, scoped, tag = 'input window, operand 0, single buffered']
    #allocation3 [shape = 's32[1]{0}', space=sflag, size = 0x4, scoped, tag = 'scoped memory for football_match_predictor_outcome.1']
    #allocation4 [shape = 's32[1]{0}', space=sflag, size = 0x4, scoped, tag = 'scoped memory for football_match_predictor_outcome.1']
    #allocation5 [shape = 'u8[8192]{0}', space=vmem, size = 0x2000, scoped, tag = 'input window, operand 7, single buffered']
    #allocation6 [shape = 's32[1]{0}', space=sflag, size = 0x4, scoped, tag = 'scoped memory for football_match_predictor_outcome.1']
    #allocation7 [shape = 'u8[2048]{0}', space=vmem, size = 0x800, scoped, tag = 'output window, operand 0, single buffered']
    %14 = vsyncpa [#allocation3], 0
    %15 = vsyncpa [#allocation6], 0
    %16 = vsyncpa [#allocation4], 0
    // Predicated region
    $region2: #{football_match_predictor_outcome.1} parent=1 // pred_check
      _
    $region3: #{football_match_predictor_outcome.1} parent=1 // pred_check_branch
      %18 = sbr.rel (0) target = $region5
    $region4: #{football_match_predictor_outcome.1} parent=1 // pred_region
      %20 = vsyncadd [#allocation3], 0
      %s22 = sshll.u32 %s0, 4
      %s23 = int_to_ptr.hbm [resolvable:$true] %s22
      %s24 = sshll.u32 [#allocation2], 4
      %s25 = int_to_ptr.vmem [resolvable:$true] %s24
      %27 = dma.hbm_to_vmem [thread:$0]  %s23, 64, %s25, [#allocation3]
    $region5: #{football_match_predictor_outcome.1} parent=1 // pred_fallthru
      _
    // Predicated region
    $region6: #{football_match_predictor_outcome.1} parent=1 // pred_check
      _
    $region7: #{football_match_predictor_outcome.1} parent=1 // pred_check_branch
      %29 = sbr.rel (0) target = $region9
    $region8: #{football_match_predictor_outcome.1} parent=1 // pred_region
      _
    $region9: #{football_match_predictor_outcome.1} parent=1 // pred_fallthru
      _
    // Predicated region
    $region10: #{football_match_predictor_outcome.1} parent=1 // pred_check
      _
    $region11: #{football_match_predictor_outcome.1} parent=1 // pred_check_branch
      %31 = sbr.rel (0) target = $region13
    $region12: #{football_match_predictor_outcome.1} parent=1 // pred_region
      _
    $region13: #{football_match_predictor_outcome.1} parent=1 // pred_fallthru
      _
    // Predicated region
    $region14: #{football_match_predictor_outcome.1} parent=1 // pred_check
      _
    $region15: #{football_match_predictor_outcome.1} parent=1 // pred_check_branch
      %33 = sbr.rel (0) target = $region17
    $region16: #{football_match_predictor_outcome.1} parent=1 // pred_region
      _
    $region17: #{football_match_predictor_outcome.1} parent=1 // pred_fallthru
      _
    // Predicated region
    $region18: #{football_match_predictor_outcome.1} parent=1 // pred_check
      _
    $region19: #{football_match_predictor_outcome.1} parent=1 // pred_check_branch
      %35 = sbr.rel (0) target = $region21
    $region20: #{football_match_predictor_outcome.1} parent=1 // pred_region
      _
    $region21: #{football_match_predictor_outcome.1} parent=1 // pred_fallthru
      _
    // Predicated region
    $region22: #{football_match_predictor_outcome.1} parent=1 // pred_check
      _
    $region23: #{football_match_predictor_outcome.1} parent=1 // pred_check_branch
      %37 = sbr.rel (0) target = $region25
    $region24: #{football_match_predictor_outcome.1} parent=1 // pred_region
      _
    $region25: #{football_match_predictor_outcome.1} parent=1 // pred_fallthru
      _
    // Predicated region
    $region26: #{football_match_predictor_outcome.1} parent=1 // pred_check
      _
    $region27: #{football_match_predictor_outcome.1} parent=1 // pred_check_branch
      %39 = sbr.rel (0) target = $region29
    $region28: #{football_match_predictor_outcome.1} parent=1 // pred_region
      _
    $region29: #{football_match_predictor_outcome.1} parent=1 // pred_fallthru
      _
    // Predicated region
    $region30: #{football_match_predictor_outcome.1} parent=1 // pred_check
      _
    $region31: #{football_match_predictor_outcome.1} parent=1 // pred_check_branch
      %41 = sbr.rel (0) target = $region33
    $region32: #{football_match_predictor_outcome.1} parent=1 // pred_region
      %43 = vsyncadd [#allocation6], 0
      %s44 = sshll.u32 %s7, 4
      %s45 = int_to_ptr.hbm [resolvable:$true] %s44
      %s46 = sshll.u32 [#allocation5], 4
      %s47 = int_to_ptr.vmem [resolvable:$true] %s46
      %52 = dma.hbm_to_vmem [thread:$0]  %s45, 256, %s47, [#allocation6], 128, 128, 8
    $region33: #{football_match_predictor_outcome.1} parent=1 // pred_fallthru
      _
    // Predicated region
    $region34: #{football_match_predictor_outcome.1} parent=1 // pred_check
      _
    $region35: #{football_match_predictor_outcome.1} parent=1 // pred_check_branch
      %54 = sbr.rel (0) target = $region37
    $region36: #{football_match_predictor_outcome.1} parent=1 // pred_region
      _
    $region37: #{football_match_predictor_outcome.1} parent=1 // pred_fallthru
      _
    // Predicated region
    $region38: #{football_match_predictor_outcome.1} parent=1 // pred_check
      _
    $region39: #{football_match_predictor_outcome.1} parent=1 // pred_check_branch
      %56 = sbr.rel (0) target = $region41
    $region40: #{football_match_predictor_outcome.1} parent=1 // pred_region
      %58 = dma.done [#allocation3], 64
    $region41: #{football_match_predictor_outcome.1} parent=1 // pred_fallthru
      _
    // Predicated region
    $region42: #{football_match_predictor_outcome.1} parent=1 // pred_check
      _
    $region43: #{football_match_predictor_outcome.1} parent=1 // pred_check_branch
      %60 = sbr.rel (0) target = $region45
    $region44: #{football_match_predictor_outcome.1} parent=1 // pred_region
      %62 = dma.done [#allocation6], 256
    $region45: #{football_match_predictor_outcome.1} parent=1 // pred_fallthru
      _
    %v63 = vld [vmem:[#allocation2] sm:$0xf]
    %v64 = vld [vmem:[%s1] sm:$0xff]
    %v65 = vld [vmem:[%s1 + $0x8] sm:$0xff]
    %v66 = vld [vmem:[%s2] sm:$0x1]
    %v68 = vperm.slane %v66, 0
    %vm70 = vcmask 130048
    %v72 = vsel %vm70, %v63, 0
    %74 = vmatpush.msra.mxu0 0.0
    %75 = vmatpush.msra.mxu0 0.0
    %76 = vmatpush.msra.mxu0 0.0
    %77 = vmatpush.msra.mxu0 0.0
    %78 = vmatpush.msra.mxu0 0.0
    %79 = vmatpush.msra.mxu0 0.0
    %80 = vmatpush.msra.mxu0 0.0
    %81 = vmatpush.msra.mxu0 0.0
    %82 = vmatpush.msra.mxu0 0.0
    %83 = vmatpush.msra.mxu0 0.0
    %84 = vmatpush.msra.mxu0 0.0
    %85 = vmatpush.msra.mxu0 0.0
    %86 = vmatpush.msra.mxu0 0.0
    %87 = vmatpush.msra.mxu0 0.0
    %88 = vmatpush.msra.mxu0 %v65
    %89 = vmatpush.msra.mxu0 %v64
    %90 = vmatmul.f32.gmra.mxu0 %v72
    %v91 = vpop.f32.mrf.mxu0
    %v92 = vadd.f32 %v68, %v91
    %93 = vdwg.mxu0
    %v94 = vmax.f32 %v92, 0.0
    %v95 = vld [vmem:[%s3] sm:$0xff]
    %v96 = vld [vmem:[%s3 + $0x8] sm:$0xff]
    %v97 = vld [vmem:[%s3 + $0x10] sm:$0xff]
    %v98 = vld [vmem:[%s3 + $0x18] sm:$0xff]
    %v99 = vld [vmem:[%s4] sm:$0x1]
    %v101 = vperm.slane %v99, 0
    %vm103 = vcmask 261120
    %v105 = vsel %vm103, %v94, 0
    %107 = vmatpush.msra.mxu0 0.0
    %108 = vmatpush.msra.mxu0 0.0
    %109 = vmatpush.msra.mxu0 0.0
    %110 = vmatpush.msra.mxu0 0.0
    %111 = vmatpush.msra.mxu0 0.0
    %112 = vmatpush.msra.mxu0 0.0
    %113 = vmatpush.msra.mxu0 0.0
    %114 = vmatpush.msra.mxu0 0.0
    %115 = vmatpush.msra.mxu0 0.0
    %116 = vmatpush.msra.mxu0 0.0
    %117 = vmatpush.msra.mxu0 0.0
    %118 = vmatpush.msra.mxu0 0.0
    %119 = vmatpush.msra.mxu0 %v98
    %120 = vmatpush.msra.mxu0 %v97
    %121 = vmatpush.msra.mxu0 %v96
    %122 = vmatpush.msra.mxu0 %v95
    %123 = vmatmul.f32.gmra.mxu0 %v105
    %v124 = vpop.f32.mrf.mxu0
    %v125 = vadd.f32 %v101, %v124
    %126 = vdwg.mxu0
    %v127 = vmax.f32 %v125, 0.0
    %v128 = vld [vmem:[%s5] sm:$0xff]
    %v129 = vld [vmem:[%s5 + $0x8] sm:$0xff]
    %v130 = vld [vmem:[%s5 + $0x10] sm:$0xff]
    %v131 = vld [vmem:[%s5 + $0x18] sm:$0xff]
    %v132 = vld [vmem:[%s6] sm:$0x1]
    %v134 = vperm.slane %v132, 0
    %v137 = vsel %vm103, %v127, 0
    %139 = vmatpush.msra.mxu0 0.0
    %140 = vmatpush.msra.mxu0 0.0
    %141 = vmatpush.msra.mxu0 0.0
    %142 = vmatpush.msra.mxu0 0.0
    %143 = vmatpush.msra.mxu0 0.0
    %144 = vmatpush.msra.mxu0 0.0
    %145 = vmatpush.msra.mxu0 0.0
    %146 = vmatpush.msra.mxu0 0.0
    %147 = vmatpush.msra.mxu0 0.0
    %148 = vmatpush.msra.mxu0 0.0
    %149 = vmatpush.msra.mxu0 0.0
    %150 = vmatpush.msra.mxu0 0.0
    %151 = vmatpush.msra.mxu0 %v131
    %152 = vmatpush.msra.mxu0 %v130
    %153 = vmatpush.msra.mxu0 %v129
    %154 = vmatpush.msra.mxu0 %v128
    %155 = vmatmul.f32.gmra.mxu0 %v137
    %v156 = vpop.f32.mrf.mxu0
    %v157 = vadd.f32 %v134, %v156
    %158 = vdwg.mxu0
    %v159 = vmax.f32 %v157, 0.0
    %v160 = vld [vmem:[#allocation5] sm:$0xff]
    %v161 = vld [vmem:[#allocation5 + $0x8] sm:$0xff]
    %v162 = vld [vmem:[%s8] sm:$0x1]
    %v164 = vperm.slane %v162, 0
    %v167 = vsel %vm70, %v159, 0
    %169 = vmatpush.msra.mxu0 0.0
    %170 = vmatpush.msra.mxu0 0.0
    %171 = vmatpush.msra.mxu0 0.0
    %172 = vmatpush.msra.mxu0 0.0
    %173 = vmatpush.msra.mxu0 0.0
    %174 = vmatpush.msra.mxu0 0.0
    %175 = vmatpush.msra.mxu0 0.0
    %176 = vmatpush.msra.mxu0 0.0
    %177 = vmatpush.msra.mxu0 0.0
    %178 = vmatpush.msra.mxu0 0.0
    %179 = vmatpush.msra.mxu0 0.0
    %180 = vmatpush.msra.mxu0 0.0
    %181 = vmatpush.msra.mxu0 0.0
    %182 = vmatpush.msra.mxu0 0.0
    %183 = vmatpush.msra.mxu0 %v161
    %184 = vmatpush.msra.mxu0 %v160
    %185 = vmatmul.f32.gmra.mxu0 %v167
    %v186 = vpop.f32.mrf.mxu0
    %v187 = vadd.f32 %v164, %v186
    %188 = vdwg.mxu0
    %vm189 = vcmask 1043456
    %v190 = vsel %vm189, %v187, -inf
    %191 = vmax.xlane.f32.xlu0 %v190
    %v192 = vpop.xlane.xlu0 %191
    %v193 = vsub.f32 %v187, %v192
    %v194 = vmul.f32 %v193, 1.442695
    %v195 = vpow.pop %v194
    %v196 = vsel %vm189, %v195, 0.0
    %197 = vadd.xlane.f32.xlu0 %v196
    %v198 = vpop.xlane.xlu0 %197
    %v199 = vrcp.pop %v198
    %v200 = vmul.f32 %v198, %v199
    %v201 = vsub.f32 1.0, %v200
    %v202 = vmul.f32 %v199, %v201
    %v203 = vadd.f32 %v199, %v202
    %vm204 = vweird.f32 %v198
    %vm205 = vweird.f32 %v199
    %vm206 = vmor %vm204, %vm205
    %v207 = vsel %vm206, %v199, %v203
    %v208 = vand.u32 2147483647, %v198
    %vm209 = vcmp.eq.f32.partialorder %v208, 8.507059e+37
    %v210 = vand.u32 %v198, 2147483648
    %v211 = vor.u32 1.1754944e-38, %v210
    %v212 = vsel %vm209, %v211, %v207
    %v213 = vmul.f32 %v195, %v212
    %vm214 = vcmask 19456
    %215 = vst.msk [vmem:[#allocation7] sm:$0xf] %vm214, %v213
    // Predicated region
    $region46: #{football_match_predictor_outcome.1} parent=1 // pred_check
      _
    $region47: #{football_match_predictor_outcome.1} parent=1 // pred_check_branch
      %217 = sbr.rel (0) target = $region49
    $region48: #{football_match_predictor_outcome.1} parent=1 // pred_region
      %219 = vsyncadd [#allocation4], 0
      %s221 = sshll.u32 [#allocation7], 4
      %s222 = int_to_ptr.vmem [resolvable:$true] %s221
      %s223 = sshll.u32 %s9, 4
      %s224 = int_to_ptr.hbm [resolvable:$true] %s223
      %226 = dma.vmem_to_hbm [thread:$0]  %s222, 64, %s224, [#allocation4]
    $region49: #{football_match_predictor_outcome.1} parent=1 // pred_fallthru
      _
    // Predicated region
    $region50: #{football_match_predictor_outcome.1} parent=1 // pred_check
      _
    $region51: #{football_match_predictor_outcome.1} parent=1 // pred_check_branch
      %228 = sbr.rel (0) target = $region53
    $region52: #{football_match_predictor_outcome.1} parent=1 // pred_region
      %230 = dma.done [#allocation4], 64
    $region53: #{football_match_predictor_outcome.1} parent=1 // pred_fallthru
      _
    %231 = vsyncpa [#allocation3], 1
    %232 = vsyncpa [#allocation6], 1
    %233 = vsyncpa [#allocation4], 1

</llo_original>
